<compile_context>
chip_gen: v7x
topology: tpu7x:2x2x1
jax: 0.10.0
libtpu: 0.0.40
codegen_flags: <defaults>
</compile_context>

<pallas_src>
import jax
import jax.numpy as jnp
from jax.experimental import pallas as pl
from jax.experimental.pallas import tpu as pltpu

_LANE = 128
_EPS = 1e-7
_TARGET_BLOCK_BYTES = 1 << 20   # ~1 MiB per input block


def _contrast_brightness_kernel(a_ref, p_ref, n_ref, oap_ref, oan_ref,
                                acc_ap, acc_an):
    t = pl.program_id(1)

    @pl.when(t == 0)
    def _init():
        acc_ap[...] = jnp.zeros_like(acc_ap)
        acc_an[...] = jnp.zeros_like(acc_an)

    a = a_ref[...].astype(jnp.float32)   # (1, C, T, 128)
    p = p_ref[...].astype(jnp.float32)
    n = n_ref[...].astype(jnp.float32)

    # |mean_C(a - p)| == |sum_C(a - p)| / C ; the 1/C is folded into the
    # wrapper's final division, so the channel reduction is pure VPU adds
    # (axis=1 is not a lane/sublane axis -> elementwise vreg adds).
    sap = jnp.sum(a - p, axis=1)         # (1, T, 128)
    san = jnp.sum(a - n, axis=1)

    # Elementwise accumulation into lane/sublane-dense VMEM scratch; no
    # per-step cross-lane reduction, no per-step scalar round trip.
    acc_ap[...] += jnp.abs(sap)
    acc_an[...] += jnp.abs(san)

    @pl.when(t == pl.num_programs(1) - 1)
    def _finalize():
        # One cross-sublane reduce per batch element, written to a lane-dense
        # (1, 1, 128) per-batch partial-sum output block.
        oap_ref[...] = jnp.sum(acc_ap[...], axis=1, keepdims=True)
        oan_ref[...] = jnp.sum(acc_an[...], axis=1, keepdims=True)


def contrast_brightness_loss(a, p, n):
    """a, p, n: (N, C, H, W) float arrays. Returns scalar f32 loss."""
    N, C, H, W = a.shape
    HW = H * W
    elt = jnp.dtype(a.dtype).itemsize

    # ---- choose the spatial tiling (lane-dense, ~1 MiB blocks) -----------
    hw_rows = pl.cdiv(HW, _LANE)                          # 128-lane rows
    desired_rows = max(8, _TARGET_BLOCK_BYTES // (C * _LANE * elt))
    if hw_rows <= desired_rows:
        rows_per_tile = hw_rows                           # full dim: always legal
        num_tiles = 1
    else:
        rows_per_tile = max(8, (desired_rows // 8) * 8)   # multiple of 8 sublanes
        num_tiles = pl.cdiv(hw_rows, rows_per_tile)
    hw_pad = num_tiles * rows_per_tile * _LANE

    def _prep(x):
        x3 = x.reshape(N, C, HW)
        if hw_pad != HW:
            # Zero padding is harmless: padded lanes contribute 0 to both sums.
            x3 = jnp.pad(x3, ((0, 0), (0, 0), (0, hw_pad - HW)))
        return x3.reshape(N, C, num_tiles * rows_per_tile, _LANE)

    a4, p4, n4 = _prep(a), _prep(p), _prep(n)

    in_spec = pl.BlockSpec((1, C, rows_per_tile, _LANE),
                           lambda b, t: (b, 0, t, 0))
    out_spec = pl.BlockSpec((1, 1, _LANE), lambda b, t: (b, 0, 0))

    # VMEM budget: 3 inputs x 2 buffers x block + 2 f32 scratch accumulators.
    block_bytes = C * rows_per_tile * _LANE * elt
    scratch_bytes = 2 * rows_per_tile * _LANE * 4
    vmem_need = 3 * 2 * block_bytes + scratch_bytes + 4 * _LANE * 4 * 2
    vmem_limit = int(min(max(2 * vmem_need, 16 << 20), 32 << 20))

    cost = pl.CostEstimate(
        flops=6 * N * C * HW,
        transcendentals=0,
        bytes_accessed=3 * N * C * HW * elt + 2 * N * _LANE * 4)

    out_ap, out_an = pl.pallas_call(
        _contrast_brightness_kernel,
        out_shape=(jax.ShapeDtypeStruct((N, 1, _LANE), jnp.float32),
                   jax.ShapeDtypeStruct((N, 1, _LANE), jnp.float32)),
        grid_spec=pltpu.PrefetchScalarGridSpec(
            num_scalar_prefetch=0,
            grid=(N, num_tiles),
            in_specs=[in_spec, in_spec, in_spec],
            out_specs=[out_spec, out_spec],
            scratch_shapes=[
                pltpu.VMEM((1, rows_per_tile, _LANE), jnp.float32),
                pltpu.VMEM((1, rows_per_tile, _LANE), jnp.float32),
            ]),
        compiler_params=pltpu.CompilerParams(
            dimension_semantics=("parallel", "arbitrary"),
            vmem_limit_bytes=vmem_limit),
        cost_estimate=cost,
    )(a4, p4, n4)

    # bright_* tensors have N*H*W elements each; the extra C folds in the
    # channel-mean factor that was deferred from the kernel.
    count = jnp.float32(N * HW * C)
    d_ap = jnp.sum(out_ap) / count
    d_an = jnp.sum(out_an) / count
    return d_ap / (d_an + jnp.float32(_EPS))


def _reference(a, p, n):
    bright_a = jnp.mean(a, axis=1, keepdims=True)
    bright_p = jnp.mean(p, axis=1, keepdims=True)
    bright_n = jnp.mean(n, axis=1, keepdims=True)
    d_ap = jnp.mean(jnp.abs(bright_a - bright_p))
    d_an = jnp.mean(jnp.abs(bright_a - bright_n))
    return d_ap / (d_an + 1e-07)


if __name__ == "__main__":
    key = jax.random.PRNGKey(0)
    ka, kp, kn = jax.random.split(key, 3)
    shape = (2, 4, 16, 16)  # N, C, H, W
    a = jax.random.normal(ka, shape, dtype=jnp.float32)
    p = jax.random.normal(kp, shape, dtype=jnp.float32)
    n = jax.random.normal(kn, shape, dtype=jnp.float32)

    loss = jax.block_until_ready(contrast_brightness_loss(a, p, n))
    ref = jax.block_until_ready(_reference(a, p, n))
    assert jnp.allclose(loss, ref, rtol=1e-5, atol=1e-6), (loss, ref)
    print("KERNEL_OK")
</pallas_src>

<mosaic_0001>
module attributes {stable_mosaic.version = 11 : i64} {
  func.func @_contrast_brightness_kernel(%arg0: i32, %arg1: i32, %arg2: memref<1x4x2x128xf32, #tpu.memory_space<vmem>>, %arg3: memref<1x4x2x128xf32, #tpu.memory_space<vmem>>, %arg4: memref<1x4x2x128xf32, #tpu.memory_space<vmem>>, %arg5: memref<1x1x128xf32, #tpu.memory_space<vmem>>, %arg6: memref<1x1x128xf32, #tpu.memory_space<vmem>>, %arg7: memref<1x2x128xf32, #tpu.memory_space<vmem>>, %arg8: memref<1x2x128xf32, #tpu.memory_space<vmem>>) attributes {dimension_semantics = [#tpu.dimension_semantics<parallel>, #tpu.dimension_semantics<arbitrary>], iteration_bounds = array<i64: 2, 1>, scalar_prefetch = 0 : i64, scratch_operands = 2 : i64, tpu.core_type = #tpu.core_type<tc>, window_params = [{transform_indices = @transform_0, window_bounds = array<i64: 1, 4, 2, 128>}, {transform_indices = @transform_1, window_bounds = array<i64: 1, 4, 2, 128>}, {transform_indices = @transform_2, window_bounds = array<i64: 1, 4, 2, 128>}, {transform_indices = @transform_3, window_bounds = array<i64: 1, 1, 128>}, {transform_indices = @transform_4, window_bounds = array<i64: 1, 1, 128>}]} {
    %c0_i32 = arith.constant 0 : i32
    %0 = arith.cmpi eq, %arg1, %c0_i32 : i32
    %1 = arith.extui %0 : i1 to i32
    %c0_i32_0 = arith.constant 0 : i32
    %2 = arith.cmpi ne, %1, %c0_i32_0 : i32
    scf.if %2 {
      %cst_27 = arith.constant 0.000000e+00 : f32
      %21 = vector.broadcast %cst_27 : f32 to vector<1x2x128xf32>
      %c0_28 = arith.constant 0 : index
      %c0_29 = arith.constant 0 : index
      %c0_30 = arith.constant 0 : index
      %22 = vector.load %arg7[%c0_28, %c0_29, %c0_30] : memref<1x2x128xf32, #tpu.memory_space<vmem>>, vector<1x2x128xf32>
      tpu.vector_store %arg7[%c0_28, %c0_29, %c0_30], %21 {strides = array<i32>} : memref<1x2x128xf32, #tpu.memory_space<vmem>>, vector<1x2x128xf32>,
      %cst_31 = arith.constant 0.000000e+00 : f32
      %23 = vector.broadcast %cst_31 : f32 to vector<1x2x128xf32>
      %c0_32 = arith.constant 0 : index
      %c0_33 = arith.constant 0 : index
      %c0_34 = arith.constant 0 : index
      %24 = vector.load %arg8[%c0_32, %c0_33, %c0_34] : memref<1x2x128xf32, #tpu.memory_space<vmem>>, vector<1x2x128xf32>
      tpu.vector_store %arg8[%c0_32, %c0_33, %c0_34], %23 {strides = array<i32>} : memref<1x2x128xf32, #tpu.memory_space<vmem>>, vector<1x2x128xf32>,
    } else {
    }
    %c0 = arith.constant 0 : index
    %c0_1 = arith.constant 0 : index
    %c0_2 = arith.constant 0 : index
    %c0_3 = arith.constant 0 : index
    %3 = vector.load %arg2[%c0, %c0_1, %c0_2, %c0_3] : memref<1x4x2x128xf32, #tpu.memory_space<vmem>>, vector<1x4x2x128xf32>
    %c0_4 = arith.constant 0 : index
    %c0_5 = arith.constant 0 : index
    %c0_6 = arith.constant 0 : index
    %c0_7 = arith.constant 0 : index
    %4 = vector.load %arg3[%c0_4, %c0_5, %c0_6, %c0_7] : memref<1x4x2x128xf32, #tpu.memory_space<vmem>>, vector<1x4x2x128xf32>
    %c0_8 = arith.constant 0 : index
    %c0_9 = arith.constant 0 : index
    %c0_10 = arith.constant 0 : index
    %c0_11 = arith.constant 0 : index
    %5 = vector.load %arg4[%c0_8, %c0_9, %c0_10, %c0_11] : memref<1x4x2x128xf32, #tpu.memory_space<vmem>>, vector<1x4x2x128xf32>
    %6 = arith.subf %3, %4 : vector<1x4x2x128xf32>
    %cst = arith.constant dense<0.000000e+00> : vector<1x2x128xf32>
    %7 = vector.multi_reduction <add>, %6, %cst [1] : vector<1x4x2x128xf32> to vector<1x2x128xf32>
    %8 = arith.subf %3, %5 : vector<1x4x2x128xf32>
    %cst_12 = arith.constant dense<0.000000e+00> : vector<1x2x128xf32>
    %9 = vector.multi_reduction <add>, %8, %cst_12 [1] : vector<1x4x2x128xf32> to vector<1x2x128xf32>
    %c0_13 = arith.constant 0 : index
    %c0_14 = arith.constant 0 : index
    %c0_15 = arith.constant 0 : index
    %10 = vector.load %arg7[%c0_13, %c0_14, %c0_15] : memref<1x2x128xf32, #tpu.memory_space<vmem>>, vector<1x2x128xf32>
    %11 = math.absf %7 : vector<1x2x128xf32>
    %12 = arith.addf %10, %11 : vector<1x2x128xf32>
    %c0_16 = arith.constant 0 : index
    %c0_17 = arith.constant 0 : index
    %c0_18 = arith.constant 0 : index
    %13 = vector.load %arg7[%c0_16, %c0_17, %c0_18] : memref<1x2x128xf32, #tpu.memory_space<vmem>>, vector<1x2x128xf32>
    tpu.vector_store %arg7[%c0_16, %c0_17, %c0_18], %12 {strides = array<i32>} : memref<1x2x128xf32, #tpu.memory_space<vmem>>, vector<1x2x128xf32>,
    %c0_19 = arith.constant 0 : index
    %c0_20 = arith.constant 0 : index
    %c0_21 = arith.constant 0 : index
    %14 = vector.load %arg8[%c0_19, %c0_20, %c0_21] : memref<1x2x128xf32, #tpu.memory_space<vmem>>, vector<1x2x128xf32>
    %15 = math.absf %9 : vector<1x2x128xf32>
    %16 = arith.addf %14, %15 : vector<1x2x128xf32>
    %c0_22 = arith.constant 0 : index
    %c0_23 = arith.constant 0 : index
    %c0_24 = arith.constant 0 : index
    %17 = vector.load %arg8[%c0_22, %c0_23, %c0_24] : memref<1x2x128xf32, #tpu.memory_space<vmem>>, vector<1x2x128xf32>
    tpu.vector_store %arg8[%c0_22, %c0_23, %c0_24], %16 {strides = array<i32>} : memref<1x2x128xf32, #tpu.memory_space<vmem>>, vector<1x2x128xf32>,
    %c0_i32_25 = arith.constant 0 : i32
    %18 = arith.cmpi eq, %arg1, %c0_i32_25 : i32
    %19 = arith.extui %18 : i1 to i32
    %c0_i32_26 = arith.constant 0 : i32
    %20 = arith.cmpi ne, %19, %c0_i32_26 : i32
    scf.if %20 {
      %c0_27 = arith.constant 0 : index
      %c0_28 = arith.constant 0 : index
      %c0_29 = arith.constant 0 : index
      %21 = vector.load %arg7[%c0_27, %c0_28, %c0_29] : memref<1x2x128xf32, #tpu.memory_space<vmem>>, vector<1x2x128xf32>
      %cst_30 = arith.constant dense<0.000000e+00> : vector<1x128xf32>
      %22 = vector.multi_reduction <add>, %21, %cst_30 [1] : vector<1x2x128xf32> to vector<1x128xf32>
      %23 = vector.shape_cast %22 : vector<1x128xf32> to vector<1x1x128xf32>
      %c0_31 = arith.constant 0 : index
      %c0_32 = arith.constant 0 : index
      %c0_33 = arith.constant 0 : index
      %24 = vector.load %arg5[%c0_31, %c0_32, %c0_33] : memref<1x1x128xf32, #tpu.memory_space<vmem>>, vector<1x1x128xf32>
      tpu.vector_store %arg5[%c0_31, %c0_32, %c0_33], %23 {strides = array<i32>} : memref<1x1x128xf32, #tpu.memory_space<vmem>>, vector<1x1x128xf32>,
      %c0_34 = arith.constant 0 : index
      %c0_35 = arith.constant 0 : index
      %c0_36 = arith.constant 0 : index
      %25 = vector.load %arg8[%c0_34, %c0_35, %c0_36] : memref<1x2x128xf32, #tpu.memory_space<vmem>>, vector<1x2x128xf32>
      %cst_37 = arith.constant dense<0.000000e+00> : vector<1x128xf32>
      %26 = vector.multi_reduction <add>, %25, %cst_37 [1] : vector<1x2x128xf32> to vector<1x128xf32>
      %27 = vector.shape_cast %26 : vector<1x128xf32> to vector<1x1x128xf32>
      %c0_38 = arith.constant 0 : index
      %c0_39 = arith.constant 0 : index
      %c0_40 = arith.constant 0 : index
      %28 = vector.load %arg6[%c0_38, %c0_39, %c0_40] : memref<1x1x128xf32, #tpu.memory_space<vmem>>, vector<1x1x128xf32>
      tpu.vector_store %arg6[%c0_38, %c0_39, %c0_40], %27 {strides = array<i32>} : memref<1x1x128xf32, #tpu.memory_space<vmem>>, vector<1x1x128xf32>,
    } else {
    }
    return
  }
  func.func @transform_0(%arg0: i32, %arg1: i32) -> (i32, i32, i32, i32) {
    %c0_i32 = arith.constant 0 : i32
    %c0_i32_0 = arith.constant 0 : i32
    %c0_i32_1 = arith.constant 0 : i32
    return %arg0, %c0_i32, %arg1, %c0_i32_0 : i32, i32, i32, i32
  }
  func.func @transform_1(%arg0: i32, %arg1: i32) -> (i32, i32, i32, i32) {
    %c0_i32 = arith.constant 0 : i32
    %c0_i32_0 = arith.constant 0 : i32
    %c0_i32_1 = arith.constant 0 : i32
    return %arg0, %c0_i32, %arg1, %c0_i32_0 : i32, i32, i32, i32
  }
  func.func @transform_2(%arg0: i32, %arg1: i32) -> (i32, i32, i32, i32) {
    %c0_i32 = arith.constant 0 : i32
    %c0_i32_0 = arith.constant 0 : i32
    %c0_i32_1 = arith.constant 0 : i32
    return %arg0, %c0_i32, %arg1, %c0_i32_0 : i32, i32, i32, i32
  }
  func.func @transform_3(%arg0: i32, %arg1: i32) -> (i32, i32, i32) {
    %c0_i32 = arith.constant 0 : i32
    %c0_i32_0 = arith.constant 0 : i32
    %c0_i32_1 = arith.constant 0 : i32
    return %arg0, %c0_i32, %c0_i32_0 : i32, i32, i32
  }
  func.func @transform_4(%arg0: i32, %arg1: i32) -> (i32, i32, i32) {
    %c0_i32 = arith.constant 0 : i32
    %c0_i32_0 = arith.constant 0 : i32
    %c0_i32_1 = arith.constant 0 : i32
    return %arg0, %c0_i32, %c0_i32_0 : i32, i32, i32
  }
}

</mosaic_0001>

<llo_original>
// kernel: tpu_custom_call.1
$region0: #{tpu_custom_call.1}
  #allocation0 [shape = 'u32[]', space=smem, size = 0x4, offset = 0x4, fixed_abs, tag = 'smem constant byte address 0x4 - core index']
  #allocation1 [shape = 'u32[144,128]{1,0:T(1,128)}', space=vmem, size = 0x12000, scoped, tag = 'internal scratch']
  #allocation2 [shape = 'f32[1,2,128]{2,1,0:T(2,128)}', space=vmem, size = 0x400, scoped, tag = 'scratch operand']
  #allocation3 [shape = 'f32[1,2,128]{2,1,0:T(2,128)}', space=vmem, size = 0x400, scoped, tag = 'scratch operand']
  %s0 = inlined_call_operand.hbm [shape: f32[2,4,2,128], index: 0, kind: input, shape index: {}]
  %s1 = inlined_call_operand.hbm [shape: f32[2,4,2,128], index: 1, kind: input, shape index: {}]
  %s2 = inlined_call_operand.hbm [shape: f32[2,4,2,128], index: 2, kind: input, shape index: {}]
  %s3 = inlined_call_operand.hbm [shape: f32[2,1,128], index: 3, kind: output, shape index: {0}]
  %s4 = inlined_call_operand.hbm [shape: f32[2,1,128], index: 4, kind: output, shape index: {1}]
  %5 = xla_tuple %s3, %s4
  %s6 = sld [smem:[#allocation0]]
  $region73: #{tpu_custom_call.1} parent=0
    _
  %s8 = ssub.s32 1, %s6
  %s9 = scalar_select 0, %s8, %s6
  $region1: #{tpu_custom_call.1} parent=0
    #allocation4 [shape = 'u8[8192]{0}', space=vmem, size = 0x2000, scoped, tag = 'input window, operand 0']
    #allocation5 [shape = 's32[2]{0}', space=sflag, size = 0x8, scoped, tag = 'scoped memory for tpu_custom_call.1']
    #allocation6 [shape = 's32[2]{0}', space=sflag, size = 0x8, scoped, tag = 'scoped memory for tpu_custom_call.1']
    #allocation7 [shape = 'u8[8192]{0}', space=vmem, size = 0x2000, scoped, tag = 'input window, operand 1']
    #allocation8 [shape = 's32[2]{0}', space=sflag, size = 0x8, scoped, tag = 'scoped memory for tpu_custom_call.1']
    #allocation9 [shape = 'u8[8192]{0}', space=vmem, size = 0x2000, scoped, tag = 'input window, operand 2']
    #allocation10 [shape = 'u8[1024]{0}', space=vmem, size = 0x400, scoped, tag = 'output window, operand 0']
    #allocation11 [shape = 'u8[1024]{0}', space=vmem, size = 0x400, scoped, tag = 'output window, operand 1']
    #allocation12 [shape = 's32[2]{0}', space=sflag, size = 0x8, scoped, tag = 'scoped memory for tpu_custom_call.1']
    %10 = vsyncpa [#allocation5], 0
    %s11 = scalar_lea.sflag [#allocation5], 1
    %12 = vsyncpa %s11, 0
    %13 = vsyncpa [#allocation8], 0
    %s14 = scalar_lea.sflag [#allocation8], 1
    %15 = vsyncpa %s14, 0
    %16 = vsyncpa [#allocation6], 0
    %s17 = scalar_lea.sflag [#allocation6], 1
    %18 = vsyncpa %s17, 0
    %19 = vsyncpa [#allocation12], 0
    %s20 = scalar_lea.sflag [#allocation12], 1
    %21 = vsyncpa %s20, 0
    loop: start=0, step=1, limit=4
    $region2: #{tpu_custom_call.1} parent=1 // loop_pre_header
      _
    $region3: #{tpu_custom_call.1} parent=1 // loop_header
      %s23 = sphi 0, %s27
      %p24 = scmp.ge.s32.totalorder %s23, 4
      %s30 = sphi 0, %s42
      %s31 = sphi 0, %s38
      %s32 = sphi 0, %s30
      %s33 = sphi 0, %s31
      %s34 = sphi 0, %s32
      %s35 = sphi 0, %s33
      %s47 = sphi 0, %s49
      %s50 = sphi 0, %s47
      %s51 = sphi 0, %s50
      %s67 = sphi 0, %s51
      %s75 = sphi 0, %s77
      %s78 = sphi 0, %s75
      %s79 = sphi 0, %s78
      %s95 = sphi 0, %s79
      %s103 = sphi 0, %s105
      %s106 = sphi 0, %s103
      %s107 = sphi 0, %s106
      %s123 = sphi 0, %s107
      %s129 = sphi 0, %s131
      %s132 = sphi 0, %s129
      %s133 = sphi 0, %s132
      %s149 = sphi 0, %s133
      %s155 = sphi 0, %s157
      %s158 = sphi 0, %s155
      %s159 = sphi 0, %s158
      %s175 = sphi 0, %s159
    $region4: #{tpu_custom_call.1} parent=1 // loop_header_branch
      %26 = sbr.rel (%p24) target = $region8
    $region5: #{tpu_custom_call.1} parent=1 // loop_body
      %s28 = ssub.s32 %s23, 1
      %s29 = ssub.s32 %s23, 2
      %s36 = sadd.s32 1, %s31
      %p37 = scmp.ge.s32.totalorder %s36, 1
      %s38 = scalar_select %p37, 0, %s36
      %s39 = sadd.s32 1, %s30
      %s40 = scalar_select %p37, %s39, %s30
      %p41 = scmp.ge.s32.totalorder %s40, 2
      %s42 = scalar_select %p41, 0, %s40
      %s43 = ssub.s32 %s30, %s42
      %s44 = ssub.s32 %s31, %s38
      %s45 = sor.u32 %s43, %s44
      %p46 = scmp.eq.s32.totalorder %s45, 0
      %s48 = sadd.s32 %s47, 1
      %s49 = scalar_select %p46, %s47, %s48
      %p52 = pneg %p46
      %p53 = scmp.eq.s32.totalorder %s23, 1
      %p54 = por %p52, %p53
      %p55 = scmp.ne.s32.totalorder %s47, %s50
      %p56 = scmp.eq.s32.totalorder %s23, 0
      %p57 = por %p55, %p56
      %p58 = scmp.ne.s32.totalorder %s47, %s50
      %p59 = scmp.eq.s32.totalorder %s28, 1
      %p60 = por %p58, %p59
      %p61 = scmp.ne.s32.totalorder %s50, %s51
      %p62 = scmp.eq.s32.totalorder %s28, 0
      %p63 = por %p61, %p62
      %p64 = scmp.ne.s32.totalorder %s50, %s51
      %p65 = scmp.eq.s32.totalorder %s29, 1
      %p66 = por %p64, %p65
      %p68 = scmp.ne.s32.totalorder %s51, %s67
      %p69 = scmp.eq.s32.totalorder %s29, 0
      %p70 = por %p68, %p69
      %s71 = ssub.s32 %s30, %s42
      %s72 = ssub.s32 %s31, %s38
      %s73 = sor.u32 %s71, %s72
      %p74 = scmp.eq.s32.totalorder %s73, 0
      %s76 = sadd.s32 %s75, 1
      %s77 = scalar_select %p74, %s75, %s76
      %p80 = pneg %p74
      %p81 = scmp.eq.s32.totalorder %s23, 1
      %p82 = por %p80, %p81
      %p83 = scmp.ne.s32.totalorder %s75, %s78
      %p84 = scmp.eq.s32.totalorder %s23, 0
      %p85 = por %p83, %p84
      %p86 = scmp.ne.s32.totalorder %s75, %s78
      %p87 = scmp.eq.s32.totalorder %s28, 1
      %p88 = por %p86, %p87
      %p89 = scmp.ne.s32.totalorder %s78, %s79
      %p90 = scmp.eq.s32.totalorder %s28, 0
      %p91 = por %p89, %p90
      %p92 = scmp.ne.s32.totalorder %s78, %s79
      %p93 = scmp.eq.s32.totalorder %s29, 1
      %p94 = por %p92, %p93
      %p96 = scmp.ne.s32.totalorder %s79, %s95
      %p97 = scmp.eq.s32.totalorder %s29, 0
      %p98 = por %p96, %p97
      %s99 = ssub.s32 %s30, %s42
      %s100 = ssub.s32 %s31, %s38
      %s101 = sor.u32 %s99, %s100
      %p102 = scmp.eq.s32.totalorder %s101, 0
      %s104 = sadd.s32 %s103, 1
      %s105 = scalar_select %p102, %s103, %s104
      %p108 = pneg %p102
      %p109 = scmp.eq.s32.totalorder %s23, 1
      %p110 = por %p108, %p109
      %p111 = scmp.ne.s32.totalorder %s103, %s106
      %p112 = scmp.eq.s32.totalorder %s23, 0
      %p113 = por %p111, %p112
      %p114 = scmp.ne.s32.totalorder %s103, %s106
      %p115 = scmp.eq.s32.totalorder %s28, 1
      %p116 = por %p114, %p115
      %p117 = scmp.ne.s32.totalorder %s106, %s107
      %p118 = scmp.eq.s32.totalorder %s28, 0
      %p119 = por %p117, %p118
      %p120 = scmp.ne.s32.totalorder %s106, %s107
      %p121 = scmp.eq.s32.totalorder %s29, 1
      %p122 = por %p120, %p121
      %p124 = scmp.ne.s32.totalorder %s107, %s123
      %p125 = scmp.eq.s32.totalorder %s29, 0
      %p126 = por %p124, %p125
      %s127 = ssub.s32 %s30, %s42
      %p128 = scmp.eq.s32.totalorder %s127, 0
      %s130 = sadd.s32 %s129, 1
      %s131 = scalar_select %p128, %s129, %s130
      %p134 = pneg %p128
      %p135 = scmp.eq.s32.totalorder %s23, 1
      %p136 = por %p134, %p135
      %p137 = scmp.ne.s32.totalorder %s129, %s132
      %p138 = scmp.eq.s32.totalorder %s23, 0
      %p139 = por %p137, %p138
      %p140 = scmp.ne.s32.totalorder %s129, %s132
      %p141 = scmp.eq.s32.totalorder %s28, 1
      %p142 = por %p140, %p141
      %p143 = scmp.ne.s32.totalorder %s132, %s133
      %p144 = scmp.eq.s32.totalorder %s28, 0
      %p145 = por %p143, %p144
      %p146 = scmp.ne.s32.totalorder %s132, %s133
      %p147 = scmp.eq.s32.totalorder %s29, 1
      %p148 = por %p146, %p147
      %p150 = scmp.ne.s32.totalorder %s133, %s149
      %p151 = scmp.eq.s32.totalorder %s29, 0
      %p152 = por %p150, %p151
      %s153 = ssub.s32 %s30, %s42
      %p154 = scmp.eq.s32.totalorder %s153, 0
      %s156 = sadd.s32 %s155, 1
      %s157 = scalar_select %p154, %s155, %s156
      %p160 = pneg %p154
      %p161 = scmp.eq.s32.totalorder %s23, 1
      %p162 = por %p160, %p161
      %p163 = scmp.ne.s32.totalorder %s155, %s158
      %p164 = scmp.eq.s32.totalorder %s23, 0
      %p165 = por %p163, %p164
      %p166 = scmp.ne.s32.totalorder %s155, %s158
      %p167 = scmp.eq.s32.totalorder %s28, 1
      %p168 = por %p166, %p167
      %p169 = scmp.ne.s32.totalorder %s158, %s159
      %p170 = scmp.eq.s32.totalorder %s28, 0
      %p171 = por %p169, %p170
      %p172 = scmp.ne.s32.totalorder %s158, %s159
      %p173 = scmp.eq.s32.totalorder %s29, 1
      %p174 = por %p172, %p173
      %p176 = scmp.ne.s32.totalorder %s159, %s175
      %p177 = scmp.eq.s32.totalorder %s29, 0
      %p178 = por %p176, %p177
      %p179 = scmp.le.s32.totalorder 1, %s23
      %p180 = scmp.lt.s32.totalorder %s23, 3
      %p181 = pnand %p179, %p180
      %p182 = pneg %p181
      // Predicated region
      $region9: #{tpu_custom_call.1} parent=5 // pred_check
        _
      $region10: #{tpu_custom_call.1} parent=5 // pred_check_branch
        %184 = sbr.rel (%p181) target = $region12
      $region11: #{tpu_custom_call.1} parent=5 // pred_region
        %s185 = ssub.s32 %s23, 1
      $region12: #{tpu_custom_call.1} parent=5 // pred_fallthru
        _
      %p186 = scmp.lt.s32.totalorder %s23, 2
      // Predicated region
      $region13: #{tpu_custom_call.1} parent=5 // pred_check
        %p187 = pneg %p186
      $region14: #{tpu_custom_call.1} parent=5 // pred_check_branch
        %189 = sbr.rel (%p187) target = $region16
      $region15: #{tpu_custom_call.1} parent=5 // pred_region
        // Predicated region
        $region17: #{tpu_custom_call.1} parent=15 // pred_check
          %p190 = pneg %p57
        $region18: #{tpu_custom_call.1} parent=15 // pred_check_branch
          %192 = sbr.rel (%p190) target = $region20
        $region19: #{tpu_custom_call.1} parent=15 // pred_region
          %s193 = sand.u32 %s47, 1
          %s194 = scalar_lea.sflag [#allocation5], %s193
          %s195 = sand.u32 %s47, 1
          %s196 = smul.addr %s195, 8
          %s197 = scalar_lea.vmem [#allocation4], %s196
          %s199 = ssub.s32 128, 128
          %200 = vsyncadd %s194, %s199
          %s201 = smul.addr %s30, 4
          %s202 = sadd.s32 %s31, %s201
          %s203 = smul.addr %s202, 32
          %s204 = scalar_lea.hbm %s0, %s203
          %s205 = sshll.u32 %s197, 4
          %s206 = int_to_ptr.vmem [resolvable:$true] %s205
          %211 = dma.hbm_to_vmem [thread:$0]  %s204, 128, %s206, %s194, 32, 32, 2
        $region20: #{tpu_custom_call.1} parent=15 // pred_fallthru
          _
        // Predicated region
        $region21: #{tpu_custom_call.1} parent=15 // pred_check
          %p212 = pneg %p85
        $region22: #{tpu_custom_call.1} parent=15 // pred_check_branch
          %214 = sbr.rel (%p212) target = $region24
        $region23: #{tpu_custom_call.1} parent=15 // pred_region
          %s215 = sand.u32 %s23, 1
          %s216 = scalar_lea.sflag [#allocation8], %s215
          %s217 = sand.u32 %s75, 1
          %s218 = smul.addr %s217, 8
          %s219 = scalar_lea.vmem [#allocation7], %s218
          %s221 = ssub.s32 128, 128
          %222 = vsyncadd %s216, %s221
          %s223 = smul.addr %s30, 4
          %s224 = sadd.s32 %s31, %s223
          %s225 = smul.addr %s224, 32
          %s226 = scalar_lea.hbm %s1, %s225
          %s227 = sshll.u32 %s219, 4
          %s228 = int_to_ptr.vmem [resolvable:$true] %s227
          %233 = dma.hbm_to_vmem [thread:$0]  %s226, 128, %s228, %s216, 32, 32, 2
        $region24: #{tpu_custom_call.1} parent=15 // pred_fallthru
          _
        // Predicated region
        $region25: #{tpu_custom_call.1} parent=15 // pred_check
          %p234 = pneg %p113
        $region26: #{tpu_custom_call.1} parent=15 // pred_check_branch
          %236 = sbr.rel (%p234) target = $region28
        $region27: #{tpu_custom_call.1} parent=15 // pred_region
          %s237 = sand.u32 %s23, 1
          %s238 = scalar_lea.sflag [#allocation8], %s237
          %s239 = sand.u32 %s103, 1
          %s240 = smul.addr %s239, 8
          %s241 = scalar_lea.vmem [#allocation9], %s240
          %s243 = ssub.s32 128, 128
          %244 = vsyncadd %s238, %s243
          %s245 = smul.addr %s30, 4
          %s246 = sadd.s32 %s31, %s245
          %s247 = smul.addr %s246, 32
          %s248 = scalar_lea.hbm %s2, %s247
          %s249 = sshll.u32 %s241, 4
          %s250 = int_to_ptr.vmem [resolvable:$true] %s249
          %255 = dma.hbm_to_vmem [thread:$0]  %s248, 128, %s250, %s238, 32, 32, 2
        $region28: #{tpu_custom_call.1} parent=15 // pred_fallthru
          _
      $region16: #{tpu_custom_call.1} parent=5 // pred_fallthru
        _
      %p256 = scmp.le.s32.totalorder 1, %s23
      %p257 = scmp.lt.s32.totalorder %s23, 3
      %p258 = pnand %p256, %p257
      %p259 = pneg %p258
      // Predicated region
      $region29: #{tpu_custom_call.1} parent=5 // pred_check
        _
      $region30: #{tpu_custom_call.1} parent=5 // pred_check_branch
        %261 = sbr.rel (%p258) target = $region32
      $region31: #{tpu_custom_call.1} parent=5 // pred_region
        %s262 = ssub.s32 %s23, 1
        %s263 = sand.u32 %s50, 1
        %s264 = scalar_lea.sflag [#allocation5], %s263
        %s265 = sand.u32 %s50, 1
        %s266 = smul.addr %s265, 8
        %s267 = scalar_lea.vmem [#allocation4], %s266
        // Predicated region
        $region33: #{tpu_custom_call.1} parent=31 // pred_check
          %p268 = pneg %p63
        $region34: #{tpu_custom_call.1} parent=31 // pred_check_branch
          %270 = sbr.rel (%p268) target = $region36
        $region35: #{tpu_custom_call.1} parent=31 // pred_region
          %271 = dma.done %s264, 128
        $region36: #{tpu_custom_call.1} parent=31 // pred_fallthru
          _
        %s272 = sand.u32 %s28, 1
        %s273 = scalar_lea.sflag [#allocation8], %s272
        %s274 = sand.u32 %s78, 1
        %s275 = smul.addr %s274, 8
        %s276 = scalar_lea.vmem [#allocation7], %s275
        // Predicated region
        $region37: #{tpu_custom_call.1} parent=31 // pred_check
          %p277 = pneg %p91
        $region38: #{tpu_custom_call.1} parent=31 // pred_check_branch
          %279 = sbr.rel (%p277) target = $region40
        $region39: #{tpu_custom_call.1} parent=31 // pred_region
          %280 = dma.done %s273, 128
        $region40: #{tpu_custom_call.1} parent=31 // pred_fallthru
          _
        %s281 = sand.u32 %s28, 1
        %s282 = scalar_lea.sflag [#allocation8], %s281
        %s283 = sand.u32 %s106, 1
        %s284 = smul.addr %s283, 8
        %s285 = scalar_lea.vmem [#allocation9], %s284
        // Predicated region
        $region41: #{tpu_custom_call.1} parent=31 // pred_check
          %p286 = pneg %p119
        $region42: #{tpu_custom_call.1} parent=31 // pred_check_branch
          %288 = sbr.rel (%p286) target = $region44
        $region43: #{tpu_custom_call.1} parent=31 // pred_region
          %289 = dma.done %s282, 128
        $region44: #{tpu_custom_call.1} parent=31 // pred_fallthru
          _
        %s290 = sand.u32 %s50, 1
        %s291 = scalar_lea.sflag [#allocation5], %s290
        %s292 = sand.u32 %s50, 1
        %s293 = smul.addr %s292, 8
        %s294 = scalar_lea.vmem [#allocation4], %s293
        %p295 = pneg %p63
        %p296 = pneg %p60
        %s297 = sand.u32 %s28, 1
        %s298 = scalar_lea.sflag [#allocation8], %s297
        %s299 = sand.u32 %s78, 1
        %s300 = smul.addr %s299, 8
        %s301 = scalar_lea.vmem [#allocation7], %s300
        %p302 = pneg %p91
        %p303 = pneg %p88
        %s304 = sand.u32 %s28, 1
        %s305 = scalar_lea.sflag [#allocation8], %s304
        %s306 = sand.u32 %s106, 1
        %s307 = smul.addr %s306, 8
        %s308 = scalar_lea.vmem [#allocation9], %s307
        %p309 = pneg %p119
        %p310 = pneg %p116
        %p311 = pneg %p145
        %p312 = pneg %p142
        %s313 = sand.u32 %s132, 1
        %s314 = scalar_lea.sflag [#allocation6], %s313
        %s315 = sand.u32 %s132, 1
        %s316 = scalar_lea.vmem [#allocation10], %s315
        %p317 = pneg %p171
        %p318 = pneg %p168
        %s319 = sand.u32 %s158, 1
        %s320 = scalar_lea.sflag [#allocation12], %s319
        %s321 = sand.u32 %s158, 1
        %s322 = scalar_lea.vmem [#allocation11], %s321
        %p323 = scmp.eq.s32.totalorder %s33, 0
        // Predicated region
        $region45: #{tpu_custom_call.1} parent=31 // pred_check
          %p324 = pneg %p323
        $region46: #{tpu_custom_call.1} parent=31 // pred_check_branch
          %326 = sbr.rel (%p324) target = $region48
        $region47: #{tpu_custom_call.1} parent=31 // pred_region
          %327 = vst [vmem:[#allocation2] sm:$0x3] 0.0
          %328 = vst [vmem:[#allocation3] sm:$0x3] 0.0
        $region48: #{tpu_custom_call.1} parent=31 // pred_fallthru
          _
        %v329 = vld [vmem:[%s267] sm:$0x3]
        %v330 = vld [vmem:[%s267 + $0x2] sm:$0x3]
        %v331 = vld [vmem:[%s267 + $0x4] sm:$0x3]
        %v332 = vld [vmem:[%s267 + $0x6] sm:$0x3]
        %v333 = vld [vmem:[%s276] sm:$0x3]
        %v334 = vld [vmem:[%s276 + $0x2] sm:$0x3]
        %v335 = vld [vmem:[%s276 + $0x4] sm:$0x3]
        %v336 = vld [vmem:[%s276 + $0x6] sm:$0x3]
        %v337 = vld [vmem:[%s285] sm:$0x3]
        %v338 = vld [vmem:[%s285 + $0x2] sm:$0x3]
        %v339 = vld [vmem:[%s285 + $0x4] sm:$0x3]
        %v340 = vld [vmem:[%s285 + $0x6] sm:$0x3]
        %v341 = vsub.f32 %v329, %v333
        %v342 = vsub.f32 %v330, %v334
        %v343 = vsub.f32 %v331, %v335
        %v344 = vsub.f32 %v332, %v336
        %vm345 = vcmask 1041408
        %v346 = vsel %vm345, %v341, 0.0
        %v347 = vsel %vm345, %v342, 0.0
        %v348 = vadd.f32 %v346, %v347
        %v349 = vsel %vm345, %v343, 0.0
        %v350 = vadd.f32 %v348, %v349
        %v351 = vsel %vm345, %v344, 0.0
        %v352 = vadd.f32 %v350, %v351
        %v353 = vsub.f32 %v329, %v337
        %v354 = vsub.f32 %v330, %v338
        %v355 = vsub.f32 %v331, %v339
        %v356 = vsub.f32 %v332, %v340
        %v357 = vsel %vm345, %v353, 0.0
        %v358 = vsel %vm345, %v354, 0.0
        %v359 = vadd.f32 %v357, %v358
        %v360 = vsel %vm345, %v355, 0.0
        %v361 = vadd.f32 %v359, %v360
        %v362 = vsel %vm345, %v356, 0.0
        %v363 = vadd.f32 %v361, %v362
        %v364 = vld [vmem:[#allocation2] sm:$0x3]
        %v365 = vand.u32 2147483647, %v352
        %v366 = vadd.f32 %v364, %v365
        %367 = vst [vmem:[#allocation2] sm:$0x3] %v366
        %v368 = vld [vmem:[#allocation3] sm:$0x3]
        %v369 = vand.u32 2147483647, %v363
        %v370 = vadd.f32 %v368, %v369
        %371 = vst [vmem:[#allocation3] sm:$0x3] %v370
        // Predicated region
        $region49: #{tpu_custom_call.1} parent=31 // pred_check
          %p372 = pneg %p323
        $region50: #{tpu_custom_call.1} parent=31 // pred_check_branch
          %374 = sbr.rel (%p372) target = $region52
        $region51: #{tpu_custom_call.1} parent=31 // pred_region
          %v375 = vld [vmem:[#allocation2] sm:$0x3]
          %v376 = vsel %vm345, %v375, 0.0
          %v377 = vrot.slane %v376, 4
          %v378 = vadd.f32 %v376, %v377
          %v379 = vrot.slane %v378, 2
          %v380 = vadd.f32 %v378, %v379
          %v381 = vrot.slane %v380, 1
          %v382 = vadd.f32 %v380, %v381
          %383 = vst [vmem:[%s316] sm:$0x1] %v382
          %v384 = vld [vmem:[#allocation3] sm:$0x3]
          %v385 = vsel %vm345, %v384, 0.0
          %v386 = vrot.slane %v385, 4
          %v387 = vadd.f32 %v385, %v386
          %v388 = vrot.slane %v387, 2
          %v389 = vadd.f32 %v387, %v388
          %v390 = vrot.slane %v389, 1
          %v391 = vadd.f32 %v389, %v390
          %392 = vst [vmem:[%s322] sm:$0x1] %v391
        $region52: #{tpu_custom_call.1} parent=31 // pred_fallthru
          _
        %s393 = sand.u32 %s132, 1
        %s394 = scalar_lea.sflag [#allocation6], %s393
        %s395 = sand.u32 %s132, 1
        %s396 = scalar_lea.vmem [#allocation10], %s395
        %s397 = sand.u32 %s158, 1
        %s398 = scalar_lea.sflag [#allocation12], %s397
        %s399 = sand.u32 %s158, 1
        %s400 = scalar_lea.vmem [#allocation11], %s399
        // Predicated region
        $region53: #{tpu_custom_call.1} parent=31 // pred_check
          %p401 = pneg %p142
        $region54: #{tpu_custom_call.1} parent=31 // pred_check_branch
          %403 = sbr.rel (%p401) target = $region56
        $region55: #{tpu_custom_call.1} parent=31 // pred_region
          %s405 = ssub.s32 16, 16
          %406 = vsyncadd %s394, %s405
          %s407 = smul.addr %s32, 16
          %s408 = scalar_lea.hbm %s3, %s407
          %s410 = sshll.u32 %s396, 4
          %s411 = int_to_ptr.vmem [resolvable:$true] %s410
          %413 = dma.vmem_to_hbm [thread:$0]  %s411, 16, %s408, %s394
        $region56: #{tpu_custom_call.1} parent=31 // pred_fallthru
          _
        // Predicated region
        $region57: #{tpu_custom_call.1} parent=31 // pred_check
          %p414 = pneg %p168
        $region58: #{tpu_custom_call.1} parent=31 // pred_check_branch
          %416 = sbr.rel (%p414) target = $region60
        $region59: #{tpu_custom_call.1} parent=31 // pred_region
          %s418 = ssub.s32 16, 16
          %419 = vsyncadd %s398, %s418
          %s420 = smul.addr %s32, 16
          %s421 = scalar_lea.hbm %s4, %s420
          %s423 = sshll.u32 %s400, 4
          %s424 = int_to_ptr.vmem [resolvable:$true] %s423
          %426 = dma.vmem_to_hbm [thread:$0]  %s424, 16, %s421, %s398
        $region60: #{tpu_custom_call.1} parent=31 // pred_fallthru
          _
      $region32: #{tpu_custom_call.1} parent=5 // pred_fallthru
        _
      %p427 = scmp.le.s32.totalorder 2, %s23
      // Predicated region
      $region61: #{tpu_custom_call.1} parent=5 // pred_check
        %p428 = pneg %p427
      $region62: #{tpu_custom_call.1} parent=5 // pred_check_branch
        %430 = sbr.rel (%p428) target = $region64
      $region63: #{tpu_custom_call.1} parent=5 // pred_region
        %s431 = ssub.s32 %s23, 2
        // Predicated region
        $region65: #{tpu_custom_call.1} parent=63 // pred_check
          %p432 = pneg %p148
        $region66: #{tpu_custom_call.1} parent=63 // pred_check_branch
          %434 = sbr.rel (%p432) target = $region68
        $region67: #{tpu_custom_call.1} parent=63 // pred_region
          %s435 = sand.u32 %s133, 1
          %s436 = scalar_lea.sflag [#allocation6], %s435
          %s437 = sand.u32 %s133, 1
          %s438 = scalar_lea.vmem [#allocation10], %s437
          %439 = dma.done %s436, 16
        $region68: #{tpu_custom_call.1} parent=63 // pred_fallthru
          _
        // Predicated region
        $region69: #{tpu_custom_call.1} parent=63 // pred_check
          %p440 = pneg %p174
        $region70: #{tpu_custom_call.1} parent=63 // pred_check_branch
          %442 = sbr.rel (%p440) target = $region72
        $region71: #{tpu_custom_call.1} parent=63 // pred_region
          %s443 = sand.u32 %s159, 1
          %s444 = scalar_lea.sflag [#allocation12], %s443
          %s445 = sand.u32 %s159, 1
          %s446 = scalar_lea.vmem [#allocation11], %s445
          %447 = dma.done %s444, 16
        $region72: #{tpu_custom_call.1} parent=63 // pred_fallthru
          _
      $region64: #{tpu_custom_call.1} parent=5 // pred_fallthru
        _
    $region6: #{tpu_custom_call.1} parent=1 // loop_footer
      %s27 = sadd.s32 1, %s23
    $region7: #{tpu_custom_call.1} parent=1 // loop_footer_branch
      %22 = sbr.rel target = $region3
    $region8: #{tpu_custom_call.1} parent=1 // loop_exit
      _
    %448 = vsyncpa [#allocation5], 1
    %s449 = scalar_lea.sflag [#allocation5], 1
    %450 = vsyncpa %s449, 1
    %451 = vsyncpa [#allocation8], 1
    %s452 = scalar_lea.sflag [#allocation8], 1
    %453 = vsyncpa %s452, 1
    %454 = vsyncpa [#allocation6], 1
    %s455 = scalar_lea.sflag [#allocation6], 1
    %456 = vsyncpa %s455, 1
    %457 = vsyncpa [#allocation12], 1
    %s458 = scalar_lea.sflag [#allocation12], 1
    %459 = vsyncpa %s458, 1

</llo_original>
